<compile_context>
chip_gen: v6e
topology: v6e:2x2x1
jax: 0.10.0
libtpu: 0.0.40
codegen_flags: <defaults>
</compile_context>

<pallas_src>
import math

import jax
import jax.numpy as jnp
from jax import lax
from jax.experimental import pallas as pl
from jax.experimental.pallas import tpu as pltpu


# ----------------------------------------------------------------------------
# Pallas kernels (hot path)
# ----------------------------------------------------------------------------
def _proj_filter_kernel(x_ref, a_ref, proj_ref, f_ref, out_ref, acc_ref):
    """grid = (M//bm [parallel], N//bk [arbitrary]).

    Accumulate p_tmp = x @ A^T over the pixel (N) axis; at the last contraction
    step apply the residual and the fused (detector-weight * ramp filter *
    pi/views) per-view block-diagonal filter for this sinogram tile."""
    k = pl.program_id(1)

    @pl.when(k == 0)
    def _init():
        acc_ref[...] = jnp.zeros_like(acc_ref)

    x = x_ref[...].astype(jnp.bfloat16)                        # [B, bk]
    # contract the N axis of A directly (no materialized A^T in HBM)
    acc_ref[...] += lax.dot_general(
        x, a_ref[...], (((1,), (1,)), ((), ())),
        preferred_element_type=jnp.float32)                    # [B, bm]

    @pl.when(k == pl.num_programs(1) - 1)
    def _finalize():
        y = proj_ref[...] - acc_ref[...]                       # residual [B, bm]
        out_ref[...] = jnp.dot(y, f_ref[...],
                               preferred_element_type=jnp.float32)


def _backproject_update_kernel(w_ref, filt_ref, a_ref, x_ref, out_ref, acc_ref):
    """grid = (N//bn [parallel], M//bkm [arbitrary]).

    recon = filtered @ A accumulated over the view (M) axis; at the last step
    out = weight * recon + x   (pi/views already folded into the filter)."""
    k = pl.program_id(1)

    @pl.when(k == 0)
    def _init():
        acc_ref[...] = jnp.zeros_like(acc_ref)

    f = filt_ref[...].astype(jnp.bfloat16)                     # [B, bkm]
    acc_ref[...] += jnp.dot(f, a_ref[...],
                            preferred_element_type=jnp.float32)  # [B, bn]

    @pl.when(k == pl.num_programs(1) - 1)
    def _finalize():
        out_ref[...] = w_ref[0] * acc_ref[...] + x_ref[...]


# ----------------------------------------------------------------------------
# Parameter / geometry setup (plain JAX glue — built ONCE per geometry)
# ----------------------------------------------------------------------------
def build_system_matrix(options, n_samp=64):
    """Fan-beam (equidistant detector) system matrix A of shape [views*dets, H*W]."""
    views, dets = int(options[0]), int(options[1])
    W, H = int(options[2]), int(options[3])
    dImg, dDet = float(options[4]), float(options[5])
    Ang0, dAng = float(options[6]), float(options[7])
    s2r, d2r = float(options[8]), float(options[9])

    betas = Ang0 + dAng * jnp.arange(views, dtype=jnp.float32)       # [V]
    du = (jnp.arange(dets, dtype=jnp.float32) - dets / 2 + 0.5) * dDet

    cb, sb = jnp.cos(betas), jnp.sin(betas)
    src = jnp.stack([s2r * cb, s2r * sb], axis=-1)                   # [V, 2]
    det_c = jnp.stack([-d2r * cb, -d2r * sb], axis=-1)               # [V, 2]
    tang = jnp.stack([-sb, cb], axis=-1)                             # [V, 2]
    det = det_c[:, None, :] + du[None, :, None] * tang[:, None, :]   # [V, D, 2]

    src_b = jnp.broadcast_to(src[:, None, :], det.shape)             # [V, D, 2]
    t = (jnp.arange(n_samp, dtype=jnp.float32) + 0.5) / n_samp       # [T]
    ray = det - src_b                                                # [V, D, 2]
    pts = src_b[:, :, None, :] + t[None, None, :, None] * ray[:, :, None, :]
    seg_len = jnp.sqrt(jnp.sum(ray * ray, axis=-1)) / n_samp         # [V, D]

    px = pts[..., 0] / dImg + W / 2 - 0.5
    py = H / 2 - 0.5 - pts[..., 1] / dImg
    j0 = jnp.floor(px)
    i0 = jnp.floor(py)
    fx = px - j0
    fy = py - i0
    i0 = i0.astype(jnp.int32)
    j0 = j0.astype(jnp.int32)

    M, N = views * dets, H * W
    ray_idx = jnp.broadcast_to(
        jnp.arange(M, dtype=jnp.int32).reshape(views, dets, 1),
        (views, dets, n_samp))
    A = jnp.zeros((M, N), jnp.float32)

    def scatter(A, ii, jj, wgt):
        valid = (ii >= 0) & (ii < H) & (jj >= 0) & (jj < W)
        pix = jnp.clip(ii, 0, H - 1) * W + jnp.clip(jj, 0, W - 1)
        wgt = jnp.where(valid, wgt, 0.0) * seg_len[..., None]
        return A.at[ray_idx.reshape(-1), pix.reshape(-1)].add(
            wgt.reshape(-1).astype(jnp.float32))

    A = scatter(A, i0, j0, (1 - fx) * (1 - fy))
    A = scatter(A, i0, j0 + 1, fx * (1 - fy))
    A = scatter(A, i0 + 1, j0, (1 - fx) * fy)
    A = scatter(A, i0 + 1, j0 + 1, fx * fy)
    return A


def _build_filter_and_weights(options):
    """Per-view [dets, dets] Toeplitz ramp filter with the cosine detector
    weights and the FBP pi/views scaling folded in (replicates FBP.__init__)."""
    views, dets = int(options[0]), int(options[1])
    dDet = float(options[5])
    s2r, d2r = float(options[8]), float(options[9])
    virdet = dDet * s2r / (s2r + d2r)
    pi = math.pi

    i = jnp.arange(2 * dets - 1)
    x = i - dets + 1
    xs = jnp.where(x == 0, 1, x).astype(jnp.float32)
    f_odd = -1.0 / (pi * pi * xs * xs * virdet * virdet)
    filt = jnp.where((jnp.abs(x) % 2) == 1, f_odd, 0.0)
    filt = jnp.where(x == 0, 1.0 / (4.0 * virdet * virdet), filt).astype(jnp.float32)

    u = (jnp.arange(dets, dtype=jnp.float32) - dets / 2 + 0.5) * virdet
    w = (s2r / jnp.sqrt(s2r ** 2 + u ** 2)) * virdet                 # [D]

    d = jnp.arange(dets)
    idx = d[:, None] - d[None, :] + dets - 1                         # conv2d == Toeplitz
    F = filt[idx]                                                    # [D_in, D_out]
    coef = pi / views
    # filtered[b,e] = sum_d y[b,d] * w[d] * F[d,e] * coef
    return (w[:, None] * F) * jnp.float32(coef)                      # [D, D]


def _lcm(a, b):
    return a * b // math.gcd(a, b)


def _pick_block(dim, target, multiple):
    """Largest block <= target that divides `dim` and is a multiple of `multiple`
    (lane-dense, (8,128)-friendly). Falls back to the full dim."""
    best = None
    cand = multiple
    while cand <= min(dim, target):
        if dim % cand == 0:
            best = cand
        cand += multiple
    return best if best is not None else dim


def build_fidelity_params(options, *, n_samp=64,
                          target_block_m=256, target_block_n=256,
                          target_block_k=512):
    """Build (once per geometry, cache!) everything the kernels stream."""
    views, dets = int(options[0]), int(options[1])
    W, H = int(options[2]), int(options[3])
    M, N = views * dets, H * W

    A = build_system_matrix(options, n_samp=n_samp)                  # [M, N] f32
    F_eff = _build_filter_and_weights(options)                       # [dets, dets]

    # Tile sizes kept tiny vs the 32 MiB scoped-VMEM budget so the same
    # choices double-buffer cleanly on v5e/v6e (128 MiB) and v7x (64 MiB).
    bm = _pick_block(M, target_block_m, _lcm(128, dets))   # sinogram tile (view-aligned)
    bk = _pick_block(N, target_block_k, 128)               # pixel contraction tile
    bn = _pick_block(N, target_block_n, 128)               # image tile
    bkm = _pick_block(M, target_block_k, 128)              # sinogram contraction tile
    assert bm % dets == 0

    # Per-output-tile block-diagonal filter. Tile boundaries align with views,
    # so this is exactly the full block-diagonal ramp filter restricted to one
    # tile — the dense [M, M] kron is never materialized (views-fold savings).
    F_tile = jnp.kron(jnp.eye(bm // dets, dtype=jnp.float32), F_eff)  # [bm, bm]

    return dict(A=A.astype(jnp.bfloat16), F_tile=F_tile,
                M=M, N=N, bm=bm, bk=bk, bn=bn, bkm=bkm)


# ----------------------------------------------------------------------------
# Wrapper: fidelity_module.forward
# ----------------------------------------------------------------------------
def fidelity_forward(input_data, proj, weight, params):
    B, C, H, W = input_data.shape
    A = params["A"]                    # [M, N] bf16, single resident copy
    F_tile = params["F_tile"]          # [bm, bm] f32
    M, N = params["M"], params["N"]
    bm, bk, bn, bkm = params["bm"], params["bk"], params["bn"], params["bkm"]

    x_flat = input_data.reshape(B, N).astype(jnp.float32)
    proj_flat = proj.reshape(B, M).astype(jnp.float32)
    w_scal = jnp.asarray([weight], jnp.float32)                      # SMEM scalar

    cparams = pltpu.CompilerParams(
        dimension_semantics=("parallel", "arbitrary"),
        vmem_limit_bytes=32 * 1024 * 1024)

    a_bytes = M * N * 2  # bf16
    cost1 = pl.CostEstimate(flops=2 * B * M * N + 2 * B * M * bm,
                            transcendentals=0,
                            bytes_accessed=a_bytes + 4 * B * (N + 2 * M))
    cost2 = pl.CostEstimate(flops=2 * B * M * N,
                            transcendentals=0,
                            bytes_accessed=a_bytes + 4 * B * (M + 2 * N))

    # kernel 1: forward projection + residual + fused (weights * ramp * coef)
    filtered = pl.pallas_call(
        _proj_filter_kernel,
        out_shape=jax.ShapeDtypeStruct((B, M), jnp.float32),
        grid=(M // bm, N // bk),
        in_specs=[
            pl.BlockSpec((B, bk), lambda i, k: (0, k)),     # x
            pl.BlockSpec((bm, bk), lambda i, k: (i, k)),    # A (bf16, streamed)
            pl.BlockSpec((B, bm), lambda i, k: (0, i)),     # proj
            pl.BlockSpec((bm, bm), lambda i, k: (0, 0)),    # per-tile filter (resident)
        ],
        out_specs=pl.BlockSpec((B, bm), lambda i, k: (0, i)),
        scratch_shapes=[pltpu.VMEM((B, bm), jnp.float32)],
        compiler_params=cparams,
        cost_estimate=cost1,
    )(x_flat, A, proj_flat, F_tile)

    # kernel 2: backprojection + weighted residual update
    out_flat = pl.pallas_call(
        _backproject_update_kernel,
        out_shape=jax.ShapeDtypeStruct((B, N), jnp.float32),
        grid=(N // bn, M // bkm),
        in_specs=[
            pl.BlockSpec(memory_space=pltpu.MemorySpace.SMEM),   # weight scalar
            pl.BlockSpec((B, bkm), lambda j, k: (0, k)),         # filtered sinogram
            pl.BlockSpec((bkm, bn), lambda j, k: (k, j)),        # A (bf16, streamed)
            pl.BlockSpec((B, bn), lambda j, k: (0, j)),          # x
        ],
        out_specs=pl.BlockSpec((B, bn), lambda j, k: (0, j)),
        scratch_shapes=[pltpu.VMEM((B, bn), jnp.float32)],
        compiler_params=cparams,
        cost_estimate=cost2,
    )(w_scal, filtered, A, x_flat)

    return out_flat.reshape(B, C, H, W)


# ----------------------------------------------------------------------------
if __name__ == "__main__":
    key = jax.random.PRNGKey(0)
    k1, k2 = jax.random.split(key)

    B, H, W = 2, 32, 32
    views, dets = 32, 32
    # options = [views, dets, width, height, dImg, dDet, Ang0, dAng, s2r, d2r,
    #            binshift, scan_type]
    options = jnp.array(
        [views, dets, W, H, 1.0, 2.0, 0.0, 2.0 * math.pi / views,
         40.0, 40.0, 0.0, 0.0], jnp.float32)

    # Geometry-dependent parameters are built ONCE and cached; only the two
    # Pallas kernels run per forward call.
    params = build_fidelity_params(options)

    input_data = jax.random.normal(k1, (B, 1, H, W), jnp.float32)
    proj = jax.random.normal(k2, (B, 1, views, dets), jnp.float32)
    weight = 0.5  # deterministic init of the (uninitialized) scalar nn.Parameter

    out = fidelity_forward(input_data, proj, weight, params)
    jax.block_until_ready(out)
    assert out.shape == (B, 1, H, W) and out.dtype == jnp.float32

    # --- plain-JAX reference (same bf16 A / fused filter) ---
    x_flat = input_data.reshape(B, -1)
    p_flat = proj.reshape(B, -1)
    Abf = params["A"]
    F_eff = params["F_tile"][:dets, :dets]
    p_tmp = lax.dot_general(x_flat.astype(jnp.bfloat16), Abf,
                            (((1,), (1,)), ((), ())),
                            preferred_element_type=jnp.float32)
    y = (p_flat - p_tmp).reshape(B, views, dets)
    filt_ref = jnp.einsum("bvd,de->bve", y, F_eff).reshape(B, -1)
    recon_ref = jnp.dot(filt_ref.astype(jnp.bfloat16), Abf,
                        preferred_element_type=jnp.float32)
    ref = (weight * recon_ref + x_flat).reshape(B, 1, H, W)
    assert bool(jnp.all(jnp.isfinite(out)))
    assert bool(jnp.allclose(out, ref, rtol=5e-2, atol=5e-2)), \
        float(jnp.max(jnp.abs(out - ref)))

    print("KERNEL_OK")
</pallas_src>

<mosaic_0001>
module attributes {stable_mosaic.version = 11 : i64} {
  func.func @_proj_filter_kernel(%arg0: i32, %arg1: i32, %arg2: memref<2x512xf32, #tpu.memory_space<vmem>>, %arg3: memref<256x512xbf16, #tpu.memory_space<vmem>>, %arg4: memref<2x256xf32, #tpu.memory_space<vmem>>, %arg5: memref<256x256xf32, #tpu.memory_space<vmem>>, %arg6: memref<2x256xf32, #tpu.memory_space<vmem>>, %arg7: memref<2x256xf32, #tpu.memory_space<vmem>>) attributes {dimension_semantics = [#tpu.dimension_semantics<parallel>, #tpu.dimension_semantics<arbitrary>], iteration_bounds = array<i64: 4, 2>, scalar_prefetch = 0 : i64, scratch_operands = 1 : i64, tpu.core_type = #tpu.core_type<tc>, window_params = [{transform_indices = @transform_0, window_bounds = array<i64: 2, 512>}, {transform_indices = @transform_1, window_bounds = array<i64: 256, 512>}, {transform_indices = @transform_2, window_bounds = array<i64: 2, 256>}, {pipeline_mode = #tpu.pipeline_mode<synchronous>, transform_indices = @transform_3, window_bounds = array<i64: 256, 256>}, {transform_indices = @transform_4, window_bounds = array<i64: 2, 256>}]} {
    %c0_i32 = arith.constant 0 : i32
    %0 = arith.cmpi eq, %arg1, %c0_i32 : i32
    %1 = arith.extui %0 : i1 to i32
    %c0_i32_0 = arith.constant 0 : i32
    %2 = arith.cmpi ne, %1, %c0_i32_0 : i32
    scf.if %2 {
      %cst_9 = arith.constant 0.000000e+00 : f32
      %13 = vector.broadcast %cst_9 : f32 to vector<2x256xf32>
      %c0_10 = arith.constant 0 : index
      %c0_11 = arith.constant 0 : index
      %14 = vector.load %arg7[%c0_10, %c0_11] : memref<2x256xf32, #tpu.memory_space<vmem>>, vector<2x256xf32>
      tpu.vector_store %arg7[%c0_10, %c0_11], %13 {strides = array<i32>} : memref<2x256xf32, #tpu.memory_space<vmem>>, vector<2x256xf32>,
    } else {
    }
    %c0 = arith.constant 0 : index
    %c0_1 = arith.constant 0 : index
    %3 = vector.load %arg2[%c0, %c0_1] : memref<2x512xf32, #tpu.memory_space<vmem>>, vector<2x512xf32>
    %4 = arith.truncf %3 : vector<2x512xf32> to vector<2x512xbf16>
    %c0_2 = arith.constant 0 : index
    %c0_3 = arith.constant 0 : index
    %5 = vector.load %arg7[%c0_2, %c0_3] : memref<2x256xf32, #tpu.memory_space<vmem>>, vector<2x256xf32>
    %c0_4 = arith.constant 0 : index
    %c0_5 = arith.constant 0 : index
    %6 = vector.load %arg3[%c0_4, %c0_5] : memref<256x512xbf16, #tpu.memory_space<vmem>>, vector<256x512xbf16>
    %cst = arith.constant dense<0.000000e+00> : vector<2x256xf32>
    %7 = tpu.matmul %4, %6, %cst {dimension_numbers = #tpu.dot_dimension_numbers<[1], [1], [0], [0], [0, 0, 1, 0], [], []>} : vector<2x512xbf16>, vector<256x512xbf16>, vector<2x256xf32> -> vector<2x256xf32>
    %8 = arith.addf %5, %7 : vector<2x256xf32>
    %c0_6 = arith.constant 0 : index
    %c0_7 = arith.constant 0 : index
    %9 = vector.load %arg7[%c0_6, %c0_7] : memref<2x256xf32, #tpu.memory_space<vmem>>, vector<2x256xf32>
    tpu.vector_store %arg7[%c0_6, %c0_7], %8 {strides = array<i32>} : memref<2x256xf32, #tpu.memory_space<vmem>>, vector<2x256xf32>,
    %c1_i32 = arith.constant 1 : i32
    %10 = arith.cmpi eq, %arg1, %c1_i32 : i32
    %11 = arith.extui %10 : i1 to i32
    %c0_i32_8 = arith.constant 0 : i32
    %12 = arith.cmpi ne, %11, %c0_i32_8 : i32
    scf.if %12 {
      %c0_9 = arith.constant 0 : index
      %c0_10 = arith.constant 0 : index
      %13 = vector.load %arg4[%c0_9, %c0_10] : memref<2x256xf32, #tpu.memory_space<vmem>>, vector<2x256xf32>
      %c0_11 = arith.constant 0 : index
      %c0_12 = arith.constant 0 : index
      %14 = vector.load %arg7[%c0_11, %c0_12] : memref<2x256xf32, #tpu.memory_space<vmem>>, vector<2x256xf32>
      %15 = arith.subf %13, %14 : vector<2x256xf32>
      %c0_13 = arith.constant 0 : index
      %c0_14 = arith.constant 0 : index
      %16 = vector.load %arg5[%c0_13, %c0_14] : memref<256x256xf32, #tpu.memory_space<vmem>>, vector<256x256xf32>
      %cst_15 = arith.constant dense<0.000000e+00> : vector<2x256xf32>
      %17 = tpu.matmul %15, %16, %cst_15 {dimension_numbers = #tpu.dot_dimension_numbers<[1], [0], [0], [1], [0, 0, 1, 1], [], []>} : vector<2x256xf32>, vector<256x256xf32>, vector<2x256xf32> -> vector<2x256xf32>
      %c0_16 = arith.constant 0 : index
      %c0_17 = arith.constant 0 : index
      %18 = vector.load %arg6[%c0_16, %c0_17] : memref<2x256xf32, #tpu.memory_space<vmem>>, vector<2x256xf32>
      tpu.vector_store %arg6[%c0_16, %c0_17], %17 {strides = array<i32>} : memref<2x256xf32, #tpu.memory_space<vmem>>, vector<2x256xf32>,
    } else {
    }
    return
  }
  func.func @transform_0(%arg0: i32, %arg1: i32) -> (i32, i32) {
    %c0_i32 = arith.constant 0 : i32
    %c0_i32_0 = arith.constant 0 : i32
    return %c0_i32, %arg1 : i32, i32
  }
  func.func @transform_1(%arg0: i32, %arg1: i32) -> (i32, i32) {
    %c0_i32 = arith.constant 0 : i32
    return %arg0, %arg1 : i32, i32
  }
  func.func @transform_2(%arg0: i32, %arg1: i32) -> (i32, i32) {
    %c0_i32 = arith.constant 0 : i32
    %c0_i32_0 = arith.constant 0 : i32
    return %c0_i32, %arg0 : i32, i32
  }
  func.func @transform_3(%arg0: i32, %arg1: i32) -> (i32, i32) {
    %c0_i32 = arith.constant 0 : i32
    %c0_i32_0 = arith.constant 0 : i32
    %c0_i32_1 = arith.constant 0 : i32
    return %c0_i32, %c0_i32_0 : i32, i32
  }
  func.func @transform_4(%arg0: i32, %arg1: i32) -> (i32, i32) {
    %c0_i32 = arith.constant 0 : i32
    %c0_i32_0 = arith.constant 0 : i32
    return %c0_i32, %arg0 : i32, i32
  }
}

</mosaic_0001>

<llo_original>
// kernel: tpu_custom_call.1
$region0: #{tpu_custom_call.1}
  #allocation0 [shape = 'u32[]', space=smem, size = 0x4, offset = 0x4, fixed_abs, tag = 'smem constant byte address 0x4 - core index']
  #allocation1 [shape = 'u32[144,128]{1,0:T(1,128)}', space=vmem, size = 0x12000, scoped, tag = 'internal scratch']
  #allocation2 [shape = 'f32[2,256]{1,0:T(2,128)}', space=vmem, size = 0x800, scoped, tag = 'scratch operand']
  %s0 = inlined_call_operand.hbm [shape: f32[2,1024], index: 0, kind: input, shape index: {}]
  %s1 = inlined_call_operand.hbm [shape: bf16[1024,1024], index: 1, kind: input, shape index: {}]
  %s2 = inlined_call_operand.hbm [shape: f32[2,1024], index: 2, kind: input, shape index: {}]
  %s3 = inlined_call_operand.hbm [shape: f32[256,256], index: 3, kind: input, shape index: {}]
  %s4 = inlined_call_operand.hbm [shape: f32[2,1024], index: 4, kind: output, shape index: {}]
  %s5 = sld [smem:[#allocation0]]
  $region73: #{tpu_custom_call.1} parent=0
    _
  %s7 = ssub.s32 1, %s5
  %s8 = scalar_select 0, %s7, %s5
  $region1: #{tpu_custom_call.1} parent=0
    #allocation3 [shape = 'u8[8192]{0}', space=vmem, size = 0x2000, scoped, tag = 'input window, operand 0']
    #allocation4 [shape = 's32[2]{0}', space=sflag, size = 0x8, scoped, tag = 'scoped memory for tpu_custom_call.1']
    #allocation5 [shape = 's32[2]{0}', space=sflag, size = 0x8, scoped, tag = 'scoped memory for tpu_custom_call.1']
    #allocation6 [shape = 'u8[524288]{0}', space=vmem, size = 0x80000, scoped, tag = 'input window, operand 1']
    #allocation7 [shape = 's32[2]{0}', space=sflag, size = 0x8, scoped, tag = 'scoped memory for tpu_custom_call.1']
    #allocation8 [shape = 'u8[4096]{0}', space=vmem, size = 0x1000, scoped, tag = 'input window, operand 2']
    #allocation9 [shape = 'u8[262144]{0}', space=vmem, size = 0x40000, scoped, tag = 'input window, operand 3, single buffered']
    #allocation10 [shape = 's32[1]{0}', space=sflag, size = 0x4, scoped, tag = 'scoped memory for tpu_custom_call.1']
    #allocation11 [shape = 'u8[4096]{0}', space=vmem, size = 0x1000, scoped, tag = 'output window, operand 0']
    %9 = vsyncpa [#allocation4], 0
    %s10 = scalar_lea.sflag [#allocation4], 1
    %11 = vsyncpa %s10, 0
    %12 = vsyncpa [#allocation7], 0
    %s13 = scalar_lea.sflag [#allocation7], 1
    %14 = vsyncpa %s13, 0
    %15 = vsyncpa [#allocation10], 0
    %16 = vsyncpa [#allocation5], 0
    %s17 = scalar_lea.sflag [#allocation5], 1
    %18 = vsyncpa %s17, 0
    loop: start=0, step=1, limit=10
    $region2: #{tpu_custom_call.1} parent=1 // loop_pre_header
      _
    $region3: #{tpu_custom_call.1} parent=1 // loop_header
      %s20 = sphi 0, %s24
      %p21 = scmp.ge.s32.totalorder %s20, 10
      %s27 = sphi 0, %s39
      %s28 = sphi 0, %s35
      %s29 = sphi 0, %s27
      %s30 = sphi 0, %s28
      %s31 = sphi 0, %s29
      %s32 = sphi 0, %s30
      %s42 = sphi 0, %s44
      %s45 = sphi 0, %s42
      %s46 = sphi 0, %s45
      %s62 = sphi 0, %s46
      %s70 = sphi 0, %s72
      %s73 = sphi 0, %s70
      %s74 = sphi 0, %s73
      %s90 = sphi 0, %s74
      %s96 = sphi 0, %s98
      %s99 = sphi 0, %s96
      %s100 = sphi 0, %s99
      %s116 = sphi 0, %s100
      %s120 = sphi 0, %s120
      %s122 = sphi 0, %s120
      %s123 = sphi 0, %s122
      %s137 = sphi 0, %s123
      %s143 = sphi 0, %s145
      %s146 = sphi 0, %s143
      %s147 = sphi 0, %s146
      %s163 = sphi 0, %s147
    $region4: #{tpu_custom_call.1} parent=1 // loop_header_branch
      %23 = sbr.rel (%p21) target = $region8
    $region5: #{tpu_custom_call.1} parent=1 // loop_body
      %s25 = ssub.s32 %s20, 1
      %s26 = ssub.s32 %s20, 2
      %s33 = sadd.s32 1, %s28
      %p34 = scmp.ge.s32.totalorder %s33, 2
      %s35 = scalar_select %p34, 0, %s33
      %s36 = sadd.s32 1, %s27
      %s37 = scalar_select %p34, %s36, %s27
      %p38 = scmp.ge.s32.totalorder %s37, 4
      %s39 = scalar_select %p38, 0, %s37
      %s40 = ssub.s32 %s28, %s35
      %p41 = scmp.eq.s32.totalorder %s40, 0
      %s43 = sadd.s32 %s42, 1
      %s44 = scalar_select %p41, %s42, %s43
      %p47 = pneg %p41
      %p48 = scmp.eq.s32.totalorder %s20, 7
      %p49 = por %p47, %p48
      %p50 = scmp.ne.s32.totalorder %s42, %s45
      %p51 = scmp.eq.s32.totalorder %s20, 0
      %p52 = por %p50, %p51
      %p53 = scmp.ne.s32.totalorder %s42, %s45
      %p54 = scmp.eq.s32.totalorder %s25, 7
      %p55 = por %p53, %p54
      %p56 = scmp.ne.s32.totalorder %s45, %s46
      %p57 = scmp.eq.s32.totalorder %s25, 0
      %p58 = por %p56, %p57
      %p59 = scmp.ne.s32.totalorder %s45, %s46
      %p60 = scmp.eq.s32.totalorder %s26, 7
      %p61 = por %p59, %p60
      %p63 = scmp.ne.s32.totalorder %s46, %s62
      %p64 = scmp.eq.s32.totalorder %s26, 0
      %p65 = por %p63, %p64
      %s66 = ssub.s32 %s27, %s39
      %s67 = ssub.s32 %s28, %s35
      %s68 = sor.u32 %s66, %s67
      %p69 = scmp.eq.s32.totalorder %s68, 0
      %s71 = sadd.s32 %s70, 1
      %s72 = scalar_select %p69, %s70, %s71
      %p75 = pneg %p69
      %p76 = scmp.eq.s32.totalorder %s20, 7
      %p77 = por %p75, %p76
      %p78 = scmp.ne.s32.totalorder %s70, %s73
      %p79 = scmp.eq.s32.totalorder %s20, 0
      %p80 = por %p78, %p79
      %p81 = scmp.ne.s32.totalorder %s70, %s73
      %p82 = scmp.eq.s32.totalorder %s25, 7
      %p83 = por %p81, %p82
      %p84 = scmp.ne.s32.totalorder %s73, %s74
      %p85 = scmp.eq.s32.totalorder %s25, 0
      %p86 = por %p84, %p85
      %p87 = scmp.ne.s32.totalorder %s73, %s74
      %p88 = scmp.eq.s32.totalorder %s26, 7
      %p89 = por %p87, %p88
      %p91 = scmp.ne.s32.totalorder %s74, %s90
      %p92 = scmp.eq.s32.totalorder %s26, 0
      %p93 = por %p91, %p92
      %s94 = ssub.s32 %s27, %s39
      %p95 = scmp.eq.s32.totalorder %s94, 0
      %s97 = sadd.s32 %s96, 1
      %s98 = scalar_select %p95, %s96, %s97
      %p101 = pneg %p95
      %p102 = scmp.eq.s32.totalorder %s20, 7
      %p103 = por %p101, %p102
      %p104 = scmp.ne.s32.totalorder %s96, %s99
      %p105 = scmp.eq.s32.totalorder %s20, 0
      %p106 = por %p104, %p105
      %p107 = scmp.ne.s32.totalorder %s96, %s99
      %p108 = scmp.eq.s32.totalorder %s25, 7
      %p109 = por %p107, %p108
      %p110 = scmp.ne.s32.totalorder %s99, %s100
      %p111 = scmp.eq.s32.totalorder %s25, 0
      %p112 = por %p110, %p111
      %p113 = scmp.ne.s32.totalorder %s99, %s100
      %p114 = scmp.eq.s32.totalorder %s26, 7
      %p115 = por %p113, %p114
      %p117 = scmp.ne.s32.totalorder %s100, %s116
      %p118 = scmp.eq.s32.totalorder %s26, 0
      %p119 = por %p117, %p118
      %s121 = sadd.s32 %s120, 1
      %p124 = scmp.eq.s32.totalorder %s20, 7
      %p125 = scmp.ne.s32.totalorder %s120, %s122
      %p126 = scmp.eq.s32.totalorder %s20, 0
      %p127 = por %p125, %p126
      %p128 = scmp.ne.s32.totalorder %s120, %s122
      %p129 = scmp.eq.s32.totalorder %s25, 7
      %p130 = por %p128, %p129
      %p131 = scmp.ne.s32.totalorder %s122, %s123
      %p132 = scmp.eq.s32.totalorder %s25, 0
      %p133 = por %p131, %p132
      %p134 = scmp.ne.s32.totalorder %s122, %s123
      %p135 = scmp.eq.s32.totalorder %s26, 7
      %p136 = por %p134, %p135
      %p138 = scmp.ne.s32.totalorder %s123, %s137
      %p139 = scmp.eq.s32.totalorder %s26, 0
      %p140 = por %p138, %p139
      %s141 = ssub.s32 %s27, %s39
      %p142 = scmp.eq.s32.totalorder %s141, 0
      %s144 = sadd.s32 %s143, 1
      %s145 = scalar_select %p142, %s143, %s144
      %p148 = pneg %p142
      %p149 = scmp.eq.s32.totalorder %s20, 7
      %p150 = por %p148, %p149
      %p151 = scmp.ne.s32.totalorder %s143, %s146
      %p152 = scmp.eq.s32.totalorder %s20, 0
      %p153 = por %p151, %p152
      %p154 = scmp.ne.s32.totalorder %s143, %s146
      %p155 = scmp.eq.s32.totalorder %s25, 7
      %p156 = por %p154, %p155
      %p157 = scmp.ne.s32.totalorder %s146, %s147
      %p158 = scmp.eq.s32.totalorder %s25, 0
      %p159 = por %p157, %p158
      %p160 = scmp.ne.s32.totalorder %s146, %s147
      %p161 = scmp.eq.s32.totalorder %s26, 7
      %p162 = por %p160, %p161
      %p164 = scmp.ne.s32.totalorder %s147, %s163
      %p165 = scmp.eq.s32.totalorder %s26, 0
      %p166 = por %p164, %p165
      %p167 = scmp.le.s32.totalorder 1, %s20
      %p168 = scmp.lt.s32.totalorder %s20, 9
      %p169 = pnand %p167, %p168
      %p170 = pneg %p169
      // Predicated region
      $region9: #{tpu_custom_call.1} parent=5 // pred_check
        _
      $region10: #{tpu_custom_call.1} parent=5 // pred_check_branch
        %172 = sbr.rel (%p169) target = $region12
      $region11: #{tpu_custom_call.1} parent=5 // pred_region
        %s173 = ssub.s32 %s20, 1
        // Predicated region
        $region13: #{tpu_custom_call.1} parent=11 // pred_check
          %p174 = pneg %p133
        $region14: #{tpu_custom_call.1} parent=11 // pred_check_branch
          %176 = sbr.rel (%p174) target = $region16
        $region15: #{tpu_custom_call.1} parent=11 // pred_region
          %s178 = ssub.s32 8192, 8192
          %179 = vsyncadd [#allocation10], %s178
          %s180 = sshll.u32 [#allocation9], 4
          %s181 = int_to_ptr.vmem [resolvable:$true] %s180
          %186 = dma.hbm_to_vmem [thread:$0]  %s3, 8192, %s181, [#allocation10], 256, 256, 16
        $region16: #{tpu_custom_call.1} parent=11 // pred_fallthru
          _
      $region12: #{tpu_custom_call.1} parent=5 // pred_fallthru
        _
      %p187 = scmp.lt.s32.totalorder %s20, 8
      // Predicated region
      $region17: #{tpu_custom_call.1} parent=5 // pred_check
        %p188 = pneg %p187
      $region18: #{tpu_custom_call.1} parent=5 // pred_check_branch
        %190 = sbr.rel (%p188) target = $region20
      $region19: #{tpu_custom_call.1} parent=5 // pred_region
        // Predicated region
        $region21: #{tpu_custom_call.1} parent=19 // pred_check
          %p191 = pneg %p52
        $region22: #{tpu_custom_call.1} parent=19 // pred_check_branch
          %193 = sbr.rel (%p191) target = $region24
        $region23: #{tpu_custom_call.1} parent=19 // pred_region
          %s194 = sand.u32 %s42, 1
          %s195 = scalar_lea.sflag [#allocation4], %s194
          %s196 = sand.u32 %s42, 1
          %s197 = smul.addr %s196, 8
          %s198 = scalar_lea.vmem [#allocation3], %s197
          %s199 = smul.u32 4, %s28
          %s201 = ssub.s32 128, 128
          %202 = vsyncadd %s195, %s201
          %s203 = smul.addr %s199, 32
          %s204 = scalar_lea.hbm %s0, %s203
          %s206 = sshll.u32 %s198, 4
          %s207 = int_to_ptr.vmem [resolvable:$true] %s206
          %209 = dma.hbm_to_vmem [thread:$0]  %s204, 128, %s207, %s195
        $region24: #{tpu_custom_call.1} parent=19 // pred_fallthru
          _
        // Predicated region
        $region25: #{tpu_custom_call.1} parent=19 // pred_check
          %p210 = pneg %p80
        $region26: #{tpu_custom_call.1} parent=19 // pred_check_branch
          %212 = sbr.rel (%p210) target = $region28
        $region27: #{tpu_custom_call.1} parent=19 // pred_region
          %s213 = sand.u32 %s20, 1
          %s214 = scalar_lea.sflag [#allocation7], %s213
          %s215 = sand.u32 %s70, 1
          %s216 = smul.addr %s215, 512
          %s217 = scalar_lea.vmem [#allocation6], %s216
          %s218 = smul.u32 32, %s27
          %s219 = smul.u32 4, %s28
          %s221 = ssub.s32 8192, 8192
          %222 = vsyncadd %s214, %s221
          %s223 = smul.addr %s218, 8
          %s224 = sadd.s32 %s219, %s223
          %s225 = smul.addr %s224, 64
          %s226 = scalar_lea.hbm %s1, %s225
          %s227 = sshll.u32 %s217, 4
          %s228 = int_to_ptr.vmem [resolvable:$true] %s227
          %233 = dma.hbm_to_vmem [thread:$0]  %s226, 8192, %s228, %s214, 512, 256, 16
        $region28: #{tpu_custom_call.1} parent=19 // pred_fallthru
          _
        // Predicated region
        $region29: #{tpu_custom_call.1} parent=19 // pred_check
          %p234 = pneg %p106
        $region30: #{tpu_custom_call.1} parent=19 // pred_check_branch
          %236 = sbr.rel (%p234) target = $region32
        $region31: #{tpu_custom_call.1} parent=19 // pred_region
          %s237 = sand.u32 %s20, 1
          %s238 = scalar_lea.sflag [#allocation7], %s237
          %s239 = sand.u32 %s96, 1
          %s240 = smul.addr %s239, 4
          %s241 = scalar_lea.vmem [#allocation8], %s240
          %s242 = smul.u32 2, %s27
          %s244 = ssub.s32 64, 64
          %245 = vsyncadd %s238, %s244
          %s246 = smul.addr %s242, 32
          %s247 = scalar_lea.hbm %s2, %s246
          %s249 = sshll.u32 %s241, 4
          %s250 = int_to_ptr.vmem [resolvable:$true] %s249
          %252 = dma.hbm_to_vmem [thread:$0]  %s247, 64, %s250, %s238
        $region32: #{tpu_custom_call.1} parent=19 // pred_fallthru
          _
      $region20: #{tpu_custom_call.1} parent=5 // pred_fallthru
        _
      %p253 = scmp.le.s32.totalorder 1, %s20
      %p254 = scmp.lt.s32.totalorder %s20, 9
      %p255 = pnand %p253, %p254
      %p256 = pneg %p255
      // Predicated region
      $region33: #{tpu_custom_call.1} parent=5 // pred_check
        _
      $region34: #{tpu_custom_call.1} parent=5 // pred_check_branch
        %258 = sbr.rel (%p255) target = $region36
      $region35: #{tpu_custom_call.1} parent=5 // pred_region
        %s259 = ssub.s32 %s20, 1
        %s260 = sand.u32 %s45, 1
        %s261 = scalar_lea.sflag [#allocation4], %s260
        %s262 = sand.u32 %s45, 1
        %s263 = smul.addr %s262, 8
        %s264 = scalar_lea.vmem [#allocation3], %s263
        // Predicated region
        $region37: #{tpu_custom_call.1} parent=35 // pred_check
          %p265 = pneg %p58
        $region38: #{tpu_custom_call.1} parent=35 // pred_check_branch
          %267 = sbr.rel (%p265) target = $region40
        $region39: #{tpu_custom_call.1} parent=35 // pred_region
          %268 = dma.done %s261, 128
        $region40: #{tpu_custom_call.1} parent=35 // pred_fallthru
          _
        %s269 = sand.u32 %s25, 1
        %s270 = scalar_lea.sflag [#allocation7], %s269
        %s271 = sand.u32 %s73, 1
        %s272 = smul.addr %s271, 512
        %s273 = scalar_lea.vmem [#allocation6], %s272
        // Predicated region
        $region41: #{tpu_custom_call.1} parent=35 // pred_check
          %p274 = pneg %p86
        $region42: #{tpu_custom_call.1} parent=35 // pred_check_branch
          %276 = sbr.rel (%p274) target = $region44
        $region43: #{tpu_custom_call.1} parent=35 // pred_region
          %277 = dma.done %s270, 8192
        $region44: #{tpu_custom_call.1} parent=35 // pred_fallthru
          _
        %s278 = sand.u32 %s25, 1
        %s279 = scalar_lea.sflag [#allocation7], %s278
        %s280 = sand.u32 %s99, 1
        %s281 = smul.addr %s280, 4
        %s282 = scalar_lea.vmem [#allocation8], %s281
        // Predicated region
        $region45: #{tpu_custom_call.1} parent=35 // pred_check
          %p283 = pneg %p112
        $region46: #{tpu_custom_call.1} parent=35 // pred_check_branch
          %285 = sbr.rel (%p283) target = $region48
        $region47: #{tpu_custom_call.1} parent=35 // pred_region
          %286 = dma.done %s279, 64
        $region48: #{tpu_custom_call.1} parent=35 // pred_fallthru
          _
        // Predicated region
        $region49: #{tpu_custom_call.1} parent=35 // pred_check
          %p287 = pneg %p133
        $region50: #{tpu_custom_call.1} parent=35 // pred_check_branch
          %289 = sbr.rel (%p287) target = $region52
        $region51: #{tpu_custom_call.1} parent=35 // pred_region
          %290 = dma.done [#allocation10], 8192
        $region52: #{tpu_custom_call.1} parent=35 // pred_fallthru
          _
        %s291 = sand.u32 %s45, 1
        %s292 = scalar_lea.sflag [#allocation4], %s291
        %s293 = sand.u32 %s45, 1
        %s294 = smul.addr %s293, 8
        %s295 = scalar_lea.vmem [#allocation3], %s294
        %p296 = pneg %p58
        %p297 = pneg %p55
        %s298 = sand.u32 %s25, 1
        %s299 = scalar_lea.sflag [#allocation7], %s298
        %s300 = sand.u32 %s73, 1
        %s301 = smul.addr %s300, 512
        %s302 = scalar_lea.vmem [#allocation6], %s301
        %p303 = pneg %p86
        %p304 = pneg %p83
        %s305 = sand.u32 %s25, 1
        %s306 = scalar_lea.sflag [#allocation7], %s305
        %s307 = sand.u32 %s99, 1
        %s308 = smul.addr %s307, 4
        %s309 = scalar_lea.vmem [#allocation8], %s308
        %p310 = pneg %p112
        %p311 = pneg %p109
        %p312 = pneg %p133
        %p313 = pneg %p130
        %p314 = pneg %p159
        %p315 = pneg %p156
        %s316 = sand.u32 %s146, 1
        %s317 = scalar_lea.sflag [#allocation5], %s316
        %s318 = sand.u32 %s146, 1
        %s319 = smul.addr %s318, 4
        %s320 = scalar_lea.vmem [#allocation11], %s319
        %s321 = smul.u32 4, %s30
        %s322 = smul.u32 32, %s29
        %s323 = smul.u32 4, %s30
        %s324 = smul.u32 2, %s29
        %s325 = smul.u32 2, %s29
        %p326 = scmp.eq.s32.totalorder %s30, 0
        // Predicated region
        $region53: #{tpu_custom_call.1} parent=35 // pred_check
          %p327 = pneg %p326
        $region54: #{tpu_custom_call.1} parent=35 // pred_check_branch
          %329 = sbr.rel (%p327) target = $region56
        $region55: #{tpu_custom_call.1} parent=35 // pred_region
          %330 = vst [vmem:[#allocation2] sm:$0xf] 0.0
        $region56: #{tpu_custom_call.1} parent=35 // pred_fallthru
          _
        %v331 = vld [vmem:[%s264] sm:$0xff]
        %v333 = vcombine.high %v331, %v331
        %v335 = vunpack.c.l.s4 1983009808
        %v336 = vunpack.c.0.s8 %v335
        %v337 = vlaneseq
        %v338 = vshrl.u32 %v337, 7
        %v339 = vsub.s32 %v336, %v338
        %v340 = vrot.slane %v331, %v339
        %v342 = vunpack.c.l.s4 1983009808
        %v343 = vunpack.c.0.s8 %v342
        %v344 = vlaneseq
        %v345 = vshrl.u32 %v344, 7
        %v346 = vsub.s32 %v343, %v345
        %v347 = vrot.slane %v333, %v346
        %v348 = vcombine.high %v340, %v340
        %v349 = vcombine.high %v347, %v347
        %v354 = vpack.c.bf16 %v340, %v340
        %v355 = vpack.c.bf16 %v348, %v348
        %v356 = vpack.c.bf16 %v347, %v347
        %v357 = vpack.c.bf16 %v349, %v349
        %v358 = vld [vmem:[#allocation2] sm:$0xf]
        %v359 = vld [vmem:[%s273] sm:$0xff]
        %v360 = vld [vmem:[%s273 + $0x8] sm:$0xff]
        %v361 = vld [vmem:[%s273 + $0x10] sm:$0xff]
        %v362 = vld [vmem:[%s273 + $0x18] sm:$0xff]
        %v363 = vld [vmem:[%s273 + $0x20] sm:$0xff]
        %v364 = vld [vmem:[%s273 + $0x28] sm:$0xff]
        %v365 = vld [vmem:[%s273 + $0x30] sm:$0xff]
        %v366 = vld [vmem:[%s273 + $0x38] sm:$0xff]
        %v367 = vld [vmem:[%s273 + $0x40] sm:$0xff]
        %v368 = vld [vmem:[%s273 + $0x48] sm:$0xff]
        %v369 = vld [vmem:[%s273 + $0x50] sm:$0xff]
        %v370 = vld [vmem:[%s273 + $0x58] sm:$0xff]
        %v371 = vld [vmem:[%s273 + $0x60] sm:$0xff]
        %v372 = vld [vmem:[%s273 + $0x68] sm:$0xff]
        %v373 = vld [vmem:[%s273 + $0x70] sm:$0xff]
        %v374 = vld [vmem:[%s273 + $0x78] sm:$0xff]
        %v375 = vld [vmem:[%s273 + $0x80] sm:$0xff]
        %v376 = vld [vmem:[%s273 + $0x88] sm:$0xff]
        %v377 = vld [vmem:[%s273 + $0x90] sm:$0xff]
        %v378 = vld [vmem:[%s273 + $0x98] sm:$0xff]
        %v379 = vld [vmem:[%s273 + $0xa0] sm:$0xff]
        %v380 = vld [vmem:[%s273 + $0xa8] sm:$0xff]
        %v381 = vld [vmem:[%s273 + $0xb0] sm:$0xff]
        %v382 = vld [vmem:[%s273 + $0xb8] sm:$0xff]
        %v383 = vld [vmem:[%s273 + $0xc0] sm:$0xff]
        %v384 = vld [vmem:[%s273 + $0xc8] sm:$0xff]
        %v385 = vld [vmem:[%s273 + $0xd0] sm:$0xff]
        %v386 = vld [vmem:[%s273 + $0xd8] sm:$0xff]
        %v387 = vld [vmem:[%s273 + $0xe0] sm:$0xff]
        %v388 = vld [vmem:[%s273 + $0xe8] sm:$0xff]
        %v389 = vld [vmem:[%s273 + $0xf0] sm:$0xff]
        %v390 = vld [vmem:[%s273 + $0xf8] sm:$0xff]
        %v391 = vld [vmem:[%s273 + $0x100] sm:$0xff]
        %v392 = vld [vmem:[%s273 + $0x108] sm:$0xff]
        %v393 = vld [vmem:[%s273 + $0x110] sm:$0xff]
        %v394 = vld [vmem:[%s273 + $0x118] sm:$0xff]
        %v395 = vld [vmem:[%s273 + $0x120] sm:$0xff]
        %v396 = vld [vmem:[%s273 + $0x128] sm:$0xff]
        %v397 = vld [vmem:[%s273 + $0x130] sm:$0xff]
        %v398 = vld [vmem:[%s273 + $0x138] sm:$0xff]
        %v399 = vld [vmem:[%s273 + $0x140] sm:$0xff]
        %v400 = vld [vmem:[%s273 + $0x148] sm:$0xff]
        %v401 = vld [vmem:[%s273 + $0x150] sm:$0xff]
        %v402 = vld [vmem:[%s273 + $0x158] sm:$0xff]
        %v403 = vld [vmem:[%s273 + $0x160] sm:$0xff]
        %v404 = vld [vmem:[%s273 + $0x168] sm:$0xff]
        %v405 = vld [vmem:[%s273 + $0x170] sm:$0xff]
        %v406 = vld [vmem:[%s273 + $0x178] sm:$0xff]
        %v407 = vld [vmem:[%s273 + $0x180] sm:$0xff]
        %v408 = vld [vmem:[%s273 + $0x188] sm:$0xff]
        %v409 = vld [vmem:[%s273 + $0x190] sm:$0xff]
        %v410 = vld [vmem:[%s273 + $0x198] sm:$0xff]
        %v411 = vld [vmem:[%s273 + $0x1a0] sm:$0xff]
        %v412 = vld [vmem:[%s273 + $0x1a8] sm:$0xff]
        %v413 = vld [vmem:[%s273 + $0x1b0] sm:$0xff]
        %v414 = vld [vmem:[%s273 + $0x1b8] sm:$0xff]
        %v415 = vld [vmem:[%s273 + $0x1c0] sm:$0xff]
        %v416 = vld [vmem:[%s273 + $0x1c8] sm:$0xff]
        %v417 = vld [vmem:[%s273 + $0x1d0] sm:$0xff]
        %v418 = vld [vmem:[%s273 + $0x1d8] sm:$0xff]
        %v419 = vld [vmem:[%s273 + $0x1e0] sm:$0xff]
        %v420 = vld [vmem:[%s273 + $0x1e8] sm:$0xff]
        %v421 = vld [vmem:[%s273 + $0x1f0] sm:$0xff]
        %v422 = vld [vmem:[%s273 + $0x1f8] sm:$0xff]
        %v487 = vunpack.c.l.b16 %v359
        %v488 = vunpack.c.h.b16 %v359
        %v489 = vunpack.c.l.b16 %v360
        %v490 = vunpack.c.h.b16 %v360
        %v491 = vunpack.c.l.b16 %v361
        %v492 = vunpack.c.h.b16 %v361
        %v493 = vunpack.c.l.b16 %v362
        %v494 = vunpack.c.h.b16 %v362
        %v495 = vunpack.c.l.b16 %v363
        %v496 = vunpack.c.h.b16 %v363
        %v497 = vunpack.c.l.b16 %v364
        %v498 = vunpack.c.h.b16 %v364
        %v499 = vunpack.c.l.b16 %v365
        %v500 = vunpack.c.h.b16 %v365
        %v501 = vunpack.c.l.b16 %v366
        %v502 = vunpack.c.h.b16 %v366
        %v503 = vunpack.c.l.b16 %v367
        %v504 = vunpack.c.h.b16 %v367
        %v505 = vunpack.c.l.b16 %v368
        %v506 = vunpack.c.h.b16 %v368
        %v507 = vunpack.c.l.b16 %v369
        %v508 = vunpack.c.h.b16 %v369
        %v509 = vunpack.c.l.b16 %v370
        %v510 = vunpack.c.h.b16 %v370
        %v511 = vunpack.c.l.b16 %v371
        %v512 = vunpack.c.h.b16 %v371
        %v513 = vunpack.c.l.b16 %v372
        %v514 = vunpack.c.h.b16 %v372
        %v515 = vunpack.c.l.b16 %v373
        %v516 = vunpack.c.h.b16 %v373
        %v517 = vunpack.c.l.b16 %v374
        %v518 = vunpack.c.h.b16 %v374
        %v519 = vunpack.c.l.b16 %v375
        %v520 = vunpack.c.h.b16 %v375
        %v521 = vunpack.c.l.b16 %v376
        %v522 = vunpack.c.h.b16 %v376
        %v523 = vunpack.c.l.b16 %v377
        %v524 = vunpack.c.h.b16 %v377
        %v525 = vunpack.c.l.b16 %v378
        %v526 = vunpack.c.h.b16 %v378
        %v527 = vunpack.c.l.b16 %v379
        %v528 = vunpack.c.h.b16 %v379
        %v529 = vunpack.c.l.b16 %v380
        %v530 = vunpack.c.h.b16 %v380
        %v531 = vunpack.c.l.b16 %v381
        %v532 = vunpack.c.h.b16 %v381
        %v533 = vunpack.c.l.b16 %v382
        %v534 = vunpack.c.h.b16 %v382
        %v535 = vunpack.c.l.b16 %v383
        %v536 = vunpack.c.h.b16 %v383
        %v537 = vunpack.c.l.b16 %v384
        %v538 = vunpack.c.h.b16 %v384
        %v539 = vunpack.c.l.b16 %v385
        %v540 = vunpack.c.h.b16 %v385
        %v541 = vunpack.c.l.b16 %v386
        %v542 = vunpack.c.h.b16 %v386
        %v543 = vunpack.c.l.b16 %v387
        %v544 = vunpack.c.h.b16 %v387
        %v545 = vunpack.c.l.b16 %v388
        %v546 = vunpack.c.h.b16 %v388
        %v547 = vunpack.c.l.b16 %v389
        %v548 = vunpack.c.h.b16 %v389
        %v549 = vunpack.c.l.b16 %v390
        %v550 = vunpack.c.h.b16 %v390
        %v551 = vunpack.c.l.b16 %v391
        %v552 = vunpack.c.h.b16 %v391
        %v553 = vunpack.c.l.b16 %v392
        %v554 = vunpack.c.h.b16 %v392
        %v555 = vunpack.c.l.b16 %v393
        %v556 = vunpack.c.h.b16 %v393
        %v557 = vunpack.c.l.b16 %v394
        %v558 = vunpack.c.h.b16 %v394
        %v559 = vunpack.c.l.b16 %v395
        %v560 = vunpack.c.h.b16 %v395
        %v561 = vunpack.c.l.b16 %v396
        %v562 = vunpack.c.h.b16 %v396
        %v563 = vunpack.c.l.b16 %v397
        %v564 = vunpack.c.h.b16 %v397
        %v565 = vunpack.c.l.b16 %v398
        %v566 = vunpack.c.h.b16 %v398
        %v567 = vunpack.c.l.b16 %v399
        %v568 = vunpack.c.h.b16 %v399
        %v569 = vunpack.c.l.b16 %v400
        %v570 = vunpack.c.h.b16 %v400
        %v571 = vunpack.c.l.b16 %v401
        %v572 = vunpack.c.h.b16 %v401
        %v573 = vunpack.c.l.b16 %v402
        %v574 = vunpack.c.h.b16 %v402
        %v575 = vunpack.c.l.b16 %v403
        %v576 = vunpack.c.h.b16 %v403
        %v577 = vunpack.c.l.b16 %v404
        %v578 = vunpack.c.h.b16 %v404
        %v579 = vunpack.c.l.b16 %v405
        %v580 = vunpack.c.h.b16 %v405
        %v581 = vunpack.c.l.b16 %v406
        %v582 = vunpack.c.h.b16 %v406
        %v583 = vunpack.c.l.b16 %v407
        %v584 = vunpack.c.h.b16 %v407
        %v585 = vunpack.c.l.b16 %v408
        %v586 = vunpack.c.h.b16 %v408
        %v587 = vunpack.c.l.b16 %v409
        %v588 = vunpack.c.h.b16 %v409
        %v589 = vunpack.c.l.b16 %v410
        %v590 = vunpack.c.h.b16 %v410
        %v591 = vunpack.c.l.b16 %v411
        %v592 = vunpack.c.h.b16 %v411
        %v593 = vunpack.c.l.b16 %v412
        %v594 = vunpack.c.h.b16 %v412
        %v595 = vunpack.c.l.b16 %v413
        %v596 = vunpack.c.h.b16 %v413
        %v597 = vunpack.c.l.b16 %v414
        %v598 = vunpack.c.h.b16 %v414
        %v599 = vunpack.c.l.b16 %v415
        %v600 = vunpack.c.h.b16 %v415
        %v601 = vunpack.c.l.b16 %v416
        %v602 = vunpack.c.h.b16 %v416
        %v603 = vunpack.c.l.b16 %v417
        %v604 = vunpack.c.h.b16 %v417
        %v605 = vunpack.c.l.b16 %v418
        %v606 = vunpack.c.h.b16 %v418
        %v607 = vunpack.c.l.b16 %v419
        %v608 = vunpack.c.h.b16 %v419
        %v609 = vunpack.c.l.b16 %v420
        %v610 = vunpack.c.h.b16 %v420
        %v611 = vunpack.c.l.b16 %v421
        %v612 = vunpack.c.h.b16 %v421
        %v613 = vunpack.c.l.b16 %v422
        %v614 = vunpack.c.h.b16 %v422
        %v615 = vpack.c.b16 %v491, %v487
        %v616 = vpack.c.b16 %v492, %v488
        %v617 = vpack.c.b16 %v493, %v489
        %v618 = vpack.c.b16 %v494, %v490
        %v619 = vpack.c.b16 %v499, %v495
        %v620 = vpack.c.b16 %v500, %v496
        %v621 = vpack.c.b16 %v501, %v497
        %v622 = vpack.c.b16 %v502, %v498
        %v623 = vpack.c.b16 %v507, %v503
        %v624 = vpack.c.b16 %v508, %v504
        %v625 = vpack.c.b16 %v509, %v505
        %v626 = vpack.c.b16 %v510, %v506
        %v627 = vpack.c.b16 %v515, %v511
        %v628 = vpack.c.b16 %v516, %v512
        %v629 = vpack.c.b16 %v517, %v513
        %v630 = vpack.c.b16 %v518, %v514
        %v631 = vpack.c.b16 %v523, %v519
        %v632 = vpack.c.b16 %v524, %v520
        %v633 = vpack.c.b16 %v525, %v521
        %v634 = vpack.c.b16 %v526, %v522
        %v635 = vpack.c.b16 %v531, %v527
        %v636 = vpack.c.b16 %v532, %v528
        %v637 = vpack.c.b16 %v533, %v529
        %v638 = vpack.c.b16 %v534, %v530
        %v639 = vpack.c.b16 %v539, %v535
        %v640 = vpack.c.b16 %v540, %v536
        %v641 = vpack.c.b16 %v541, %v537
        %v642 = vpack.c.b16 %v542, %v538
        %v643 = vpack.c.b16 %v547, %v543
        %v644 = vpack.c.b16 %v548, %v544
        %v645 = vpack.c.b16 %v549, %v545
        %v646 = vpack.c.b16 %v550, %v546
        %v647 = vpack.c.b16 %v555, %v551
        %v648 = vpack.c.b16 %v556, %v552
        %v649 = vpack.c.b16 %v557, %v553
        %v650 = vpack.c.b16 %v558, %v554
        %v651 = vpack.c.b16 %v563, %v559
        %v652 = vpack.c.b16 %v564, %v560
        %v653 = vpack.c.b16 %v565, %v561
        %v654 = vpack.c.b16 %v566, %v562
        %v655 = vpack.c.b16 %v571, %v567
        %v656 = vpack.c.b16 %v572, %v568
        %v657 = vpack.c.b16 %v573, %v569
        %v658 = vpack.c.b16 %v574, %v570
        %v659 = vpack.c.b16 %v579, %v575
        %v660 = vpack.c.b16 %v580, %v576
        %v661 = vpack.c.b16 %v581, %v577
        %v662 = vpack.c.b16 %v582, %v578
        %v663 = vpack.c.b16 %v587, %v583
        %v664 = vpack.c.b16 %v588, %v584
        %v665 = vpack.c.b16 %v589, %v585
        %v666 = vpack.c.b16 %v590, %v586
        %v667 = vpack.c.b16 %v595, %v591
        %v668 = vpack.c.b16 %v596, %v592
        %v669 = vpack.c.b16 %v597, %v593
        %v670 = vpack.c.b16 %v598, %v594
        %v671 = vpack.c.b16 %v603, %v599
        %v672 = vpack.c.b16 %v604, %v600
        %v673 = vpack.c.b16 %v605, %v601
        %v674 = vpack.c.b16 %v606, %v602
        %v675 = vpack.c.b16 %v611, %v607
        %v676 = vpack.c.b16 %v612, %v608
        %v677 = vpack.c.b16 %v613, %v609
        %v678 = vpack.c.b16 %v614, %v610
        %743 = vmatprep.subr.bf16.mxu0 %v644
        %744 = vmatpush1.bf16.xpose.msra.mxu0 %v643
        %745 = vmatprep.subr.bf16.mxu0 %v640
        %746 = vmatpush1.bf16.xpose.msra.mxu0 %v639
        %747 = vmatprep.subr.bf16.mxu0 %v636
        %748 = vmatpush1.bf16.xpose.msra.mxu0 %v635
        %749 = vmatprep.subr.bf16.mxu0 %v632
        %750 = vmatpush1.bf16.xpose.msra.mxu0 %v631
        %751 = vmatprep.subr.bf16.mxu0 %v628
        %752 = vmatpush1.bf16.xpose.msra.mxu0 %v627
        %753 = vmatprep.subr.bf16.mxu0 %v624
        %754 = vmatpush1.bf16.xpose.msra.mxu0 %v623
        %755 = vmatprep.subr.bf16.mxu0 %v620
        %756 = vmatpush1.bf16.xpose.msra.mxu0 %v619
        %757 = vmatprep.subr.bf16.mxu0 %v616
        %758 = vmatpush1.bf16.xpose.msra.mxu0 %v615
        %759 = vmatprep.subr.bf16.mxu0 %v676
        %760 = vmatpush2.bf16.xpose.msra.mxu0 %v675
        %761 = vmatprep.subr.bf16.mxu0 %v672
        %762 = vmatpush2.bf16.xpose.msra.mxu0 %v671
        %763 = vmatprep.subr.bf16.mxu0 %v668
        %764 = vmatpush2.bf16.xpose.msra.mxu0 %v667
        %765 = vmatprep.subr.bf16.mxu0 %v664
        %766 = vmatpush2.bf16.xpose.msra.mxu0 %v663
        %767 = vmatprep.subr.bf16.mxu0 %v660
        %768 = vmatpush2.bf16.xpose.msra.mxu0 %v659
        %769 = vmatprep.subr.bf16.mxu0 %v656
        %770 = vmatpush2.bf16.xpose.msra.mxu0 %v655
        %771 = vmatprep.subr.bf16.mxu0 %v652
        %772 = vmatpush2.bf16.xpose.msra.mxu0 %v651
        %773 = vmatprep.subr.bf16.mxu0 %v648
        %774 = vmatpush2.bf16.xpose.msra.mxu0 %v647
        %775 = vmatprep.mubr.bf16.mxu0 %v355
        %776 = vmatmul.mubr.bf16.gmra.mxu0 %v354
        %v777 = vpop.f32.mrf.mxu0
        %v778 = vadd.f32 0.0, %v777
        %v779 = vpop.f32.mrf.mxu0
        %v780 = vadd.f32 0.0, %v779
        %v781 = vpop.f32.mrf.mxu0
        %v782 = vpop.f32.mrf.mxu0
        %783 = vdwg.mxu0
        %784 = vmatprep.subr.bf16.mxu0 %v646
        %785 = vmatpush1.bf16.xpose.msra.mxu0 %v645
        %786 = vmatprep.subr.bf16.mxu0 %v642
        %787 = vmatpush1.bf16.xpose.msra.mxu0 %v641
        %788 = vmatprep.subr.bf16.mxu0 %v638
        %789 = vmatpush1.bf16.xpose.msra.mxu0 %v637
        %790 = vmatprep.subr.bf16.mxu0 %v634
        %791 = vmatpush1.bf16.xpose.msra.mxu0 %v633
        %792 = vmatprep.subr.bf16.mxu0 %v630
        %793 = vmatpush1.bf16.xpose.msra.mxu0 %v629
        %794 = vmatprep.subr.bf16.mxu0 %v626
        %795 = vmatpush1.bf16.xpose.msra.mxu0 %v625
        %796 = vmatprep.subr.bf16.mxu0 %v622
        %797 = vmatpush1.bf16.xpose.msra.mxu0 %v621
        %798 = vmatprep.subr.bf16.mxu0 %v618
        %799 = vmatpush1.bf16.xpose.msra.mxu0 %v617
        %800 = vmatprep.subr.bf16.mxu0 %v678
        %801 = vmatpush2.bf16.xpose.msra.mxu0 %v677
        %802 = vmatprep.subr.bf16.mxu0 %v674
        %803 = vmatpush2.bf16.xpose.msra.mxu0 %v673
        %804 = vmatprep.subr.bf16.mxu0 %v670
        %805 = vmatpush2.bf16.xpose.msra.mxu0 %v669
        %806 = vmatprep.subr.bf16.mxu0 %v666
        %807 = vmatpush2.bf16.xpose.msra.mxu0 %v665
        %808 = vmatprep.subr.bf16.mxu0 %v662
        %809 = vmatpush2.bf16.xpose.msra.mxu0 %v661
        %810 = vmatprep.subr.bf16.mxu0 %v658
        %811 = vmatpush2.bf16.xpose.msra.mxu0 %v657
        %812 = vmatprep.subr.bf16.mxu0 %v654
        %813 = vmatpush2.bf16.xpose.msra.mxu0 %v653
        %814 = vmatprep.subr.bf16.mxu0 %v650
        %815 = vmatpush2.bf16.xpose.msra.mxu0 %v649
        %816 = vmatprep.mubr.bf16.mxu0 %v357
        %817 = vmatmul.mubr.bf16.gmra.mxu0 %v356
        %v818 = vpop.f32.mrf.mxu0
        %v819 = vadd.f32 %v778, %v818
        %v820 = vpop.f32.mrf.mxu0
        %v821 = vadd.f32 %v780, %v820
        %v822 = vpop.f32.mrf.mxu0
        %v823 = vpop.f32.mrf.mxu0
        %824 = vdwg.mxu0
        %v827 = vcombine.low %v819, %v821
        %v829 = vunpack.c.l.s4 1983009808
        %v830 = vunpack.c.0.s8 %v829
        %v831 = vlaneseq
        %v832 = vshrl.u32 %v831, 7
        %v833 = vsub.s32 %v830, %v832
        %v834 = vrot.slane %v827, %v833
        %v836 = vadd.f32 %v358, %v834
        %837 = vst [vmem:[#allocation2] sm:$0xf] %v836
        %p838 = scmp.eq.s32.totalorder %s30, 1
        // Predicated region
        $region57: #{tpu_custom_call.1} parent=35 // pred_check
          %p839 = pneg %p838
        $region58: #{tpu_custom_call.1} parent=35 // pred_check_branch
          %841 = sbr.rel (%p839) target = $region60
        $region59: #{tpu_custom_call.1} parent=35 // pred_region
          %v842 = vld [vmem:[%s282] sm:$0xf]
          %v843 = vld [vmem:[#allocation2] sm:$0xf]
          %v844 = vsub.f32 %v842, %v843
          %v845 = vld [vmem:[#allocation9] sm:$0xff]
          %v846 = vld [vmem:[#allocation9 + $0x8] sm:$0xff]
          %v847 = vld [vmem:[#allocation9 + $0x10] sm:$0xff]
          %v848 = vld [vmem:[#allocation9 + $0x18] sm:$0xff]
          %v849 = vld [vmem:[#allocation9 + $0x20] sm:$0xff]
          %v850 = vld [vmem:[#allocation9 + $0x28] sm:$0xff]
          %v851 = vld [vmem:[#allocation9 + $0x30] sm:$0xff]
          %v852 = vld [vmem:[#allocation9 + $0x38] sm:$0xff]
          %v853 = vld [vmem:[#allocation9 + $0x40] sm:$0xff]
          %v854 = vld [vmem:[#allocation9 + $0x48] sm:$0xff]
          %v855 = vld [vmem:[#allocation9 + $0x50] sm:$0xff]
          %v856 = vld [vmem:[#allocation9 + $0x58] sm:$0xff]
          %v857 = vld [vmem:[#allocation9 + $0x60] sm:$0xff]
          %v858 = vld [vmem:[#allocation9 + $0x68] sm:$0xff]
          %v859 = vld [vmem:[#allocation9 + $0x70] sm:$0xff]
          %v860 = vld [vmem:[#allocation9 + $0x78] sm:$0xff]
          %v861 = vld [vmem:[#allocation9 + $0x80] sm:$0xff]
          %v862 = vld [vmem:[#allocation9 + $0x88] sm:$0xff]
          %v863 = vld [vmem:[#allocation9 + $0x90] sm:$0xff]
          %v864 = vld [vmem:[#allocation9 + $0x98] sm:$0xff]
          %v865 = vld [vmem:[#allocation9 + $0xa0] sm:$0xff]
          %v866 = vld [vmem:[#allocation9 + $0xa8] sm:$0xff]
          %v867 = vld [vmem:[#allocation9 + $0xb0] sm:$0xff]
          %v868 = vld [vmem:[#allocation9 + $0xb8] sm:$0xff]
          %v869 = vld [vmem:[#allocation9 + $0xc0] sm:$0xff]
          %v870 = vld [vmem:[#allocation9 + $0xc8] sm:$0xff]
          %v871 = vld [vmem:[#allocation9 + $0xd0] sm:$0xff]
          %v872 = vld [vmem:[#allocation9 + $0xd8] sm:$0xff]
          %v873 = vld [vmem:[#allocation9 + $0xe0] sm:$0xff]
          %v874 = vld [vmem:[#allocation9 + $0xe8] sm:$0xff]
          %v875 = vld [vmem:[#allocation9 + $0xf0] sm:$0xff]
          %v876 = vld [vmem:[#allocation9 + $0xf8] sm:$0xff]
          %v877 = vld [vmem:[#allocation9 + $0x100] sm:$0xff]
          %v878 = vld [vmem:[#allocation9 + $0x108] sm:$0xff]
          %v879 = vld [vmem:[#allocation9 + $0x110] sm:$0xff]
          %v880 = vld [vmem:[#allocation9 + $0x118] sm:$0xff]
          %v881 = vld [vmem:[#allocation9 + $0x120] sm:$0xff]
          %v882 = vld [vmem:[#allocation9 + $0x128] sm:$0xff]
          %v883 = vld [vmem:[#allocation9 + $0x130] sm:$0xff]
          %v884 = vld [vmem:[#allocation9 + $0x138] sm:$0xff]
          %v885 = vld [vmem:[#allocation9 + $0x140] sm:$0xff]
          %v886 = vld [vmem:[#allocation9 + $0x148] sm:$0xff]
          %v887 = vld [vmem:[#allocation9 + $0x150] sm:$0xff]
          %v888 = vld [vmem:[#allocation9 + $0x158] sm:$0xff]
          %v889 = vld [vmem:[#allocation9 + $0x160] sm:$0xff]
          %v890 = vld [vmem:[#allocation9 + $0x168] sm:$0xff]
          %v891 = vld [vmem:[#allocation9 + $0x170] sm:$0xff]
          %v892 = vld [vmem:[#allocation9 + $0x178] sm:$0xff]
          %v893 = vld [vmem:[#allocation9 + $0x180] sm:$0xff]
          %v894 = vld [vmem:[#allocation9 + $0x188] sm:$0xff]
          %v895 = vld [vmem:[#allocation9 + $0x190] sm:$0xff]
          %v896 = vld [vmem:[#allocation9 + $0x198] sm:$0xff]
          %v897 = vld [vmem:[#allocation9 + $0x1a0] sm:$0xff]
          %v898 = vld [vmem:[#allocation9 + $0x1a8] sm:$0xff]
          %v899 = vld [vmem:[#allocation9 + $0x1b0] sm:$0xff]
          %v900 = vld [vmem:[#allocation9 + $0x1b8] sm:$0xff]
          %v901 = vld [vmem:[#allocation9 + $0x1c0] sm:$0xff]
          %v902 = vld [vmem:[#allocation9 + $0x1c8] sm:$0xff]
          %v903 = vld [vmem:[#allocation9 + $0x1d0] sm:$0xff]
          %v904 = vld [vmem:[#allocation9 + $0x1d8] sm:$0xff]
          %v905 = vld [vmem:[#allocation9 + $0x1e0] sm:$0xff]
          %v906 = vld [vmem:[#allocation9 + $0x1e8] sm:$0xff]
          %v907 = vld [vmem:[#allocation9 + $0x1f0] sm:$0xff]
          %v908 = vld [vmem:[#allocation9 + $0x1f8] sm:$0xff]
          %v911 = vunpack.c.l.s4 1983009808
          %v912 = vunpack.c.0.s8 %v911
          %v913 = vlaneseq
          %v914 = vshrl.u32 %v913, 7
          %v915 = vsub.s32 %v912, %v914
          %v916 = vrot.slane %v844, %v915
          %v917 = vcombine.high %v916, %v916
          %920 = vmatprep.subr.mxu0 %v876
          %921 = vmatpush1.msra.mxu0 %v875
          %922 = vmatprep.subr.mxu0 %v874
          %923 = vmatpush1.msra.mxu0 %v873
          %924 = vmatprep.subr.mxu0 %v872
          %925 = vmatpush1.msra.mxu0 %v871
          %926 = vmatprep.subr.mxu0 %v870
          %927 = vmatpush1.msra.mxu0 %v869
          %928 = vmatprep.subr.mxu0 %v868
          %929 = vmatpush1.msra.mxu0 %v867
          %930 = vmatprep.subr.mxu0 %v866
          %931 = vmatpush1.msra.mxu0 %v865
          %932 = vmatprep.subr.mxu0 %v864
          %933 = vmatpush1.msra.mxu0 %v863
          %934 = vmatprep.subr.mxu0 %v862
          %935 = vmatpush1.msra.mxu0 %v861
          %936 = vmatprep.subr.mxu0 %v860
          %937 = vmatpush1.msra.mxu0 %v859
          %938 = vmatprep.subr.mxu0 %v858
          %939 = vmatpush1.msra.mxu0 %v857
          %940 = vmatprep.subr.mxu0 %v856
          %941 = vmatpush1.msra.mxu0 %v855
          %942 = vmatprep.subr.mxu0 %v854
          %943 = vmatpush1.msra.mxu0 %v853
          %944 = vmatprep.subr.mxu0 %v852
          %945 = vmatpush1.msra.mxu0 %v851
          %946 = vmatprep.subr.mxu0 %v850
          %947 = vmatpush1.msra.mxu0 %v849
          %948 = vmatprep.subr.mxu0 %v848
          %949 = vmatpush1.msra.mxu0 %v847
          %950 = vmatprep.subr.mxu0 %v846
          %951 = vmatpush1.msra.mxu0 %v845
          %952 = vmatprep.subr.mxu0 %v908
          %953 = vmatpush2.msra.mxu0 %v907
          %954 = vmatprep.subr.mxu0 %v906
          %955 = vmatpush2.msra.mxu0 %v905
          %956 = vmatprep.subr.mxu0 %v904
          %957 = vmatpush2.msra.mxu0 %v903
          %958 = vmatprep.subr.mxu0 %v902
          %959 = vmatpush2.msra.mxu0 %v901
          %960 = vmatprep.subr.mxu0 %v900
          %961 = vmatpush2.msra.mxu0 %v899
          %962 = vmatprep.subr.mxu0 %v898
          %963 = vmatpush2.msra.mxu0 %v897
          %964 = vmatprep.subr.mxu0 %v896
          %965 = vmatpush2.msra.mxu0 %v895
          %966 = vmatprep.subr.mxu0 %v894
          %967 = vmatpush2.msra.mxu0 %v893
          %968 = vmatprep.subr.mxu0 %v892
          %969 = vmatpush2.msra.mxu0 %v891
          %970 = vmatprep.subr.mxu0 %v890
          %971 = vmatpush2.msra.mxu0 %v889
          %972 = vmatprep.subr.mxu0 %v888
          %973 = vmatpush2.msra.mxu0 %v887
          %974 = vmatprep.subr.mxu0 %v886
          %975 = vmatpush2.msra.mxu0 %v885
          %976 = vmatprep.subr.mxu0 %v884
          %977 = vmatpush2.msra.mxu0 %v883
          %978 = vmatprep.subr.mxu0 %v882
          %979 = vmatpush2.msra.mxu0 %v881
          %980 = vmatprep.subr.mxu0 %v880
          %981 = vmatpush2.msra.mxu0 %v879
          %982 = vmatprep.subr.mxu0 %v878
          %983 = vmatpush2.msra.mxu0 %v877
          %984 = vmatprep.mubr.f32.mxu0 %v917
          %985 = vmatmul.mubr.f32.gmra.mxu0 %v916
          %v986 = vpop.f32.mrf.mxu0
          %v987 = vadd.f32 0.0, %v986
          %v988 = vpop.f32.mrf.mxu0
          %v989 = vadd.f32 0.0, %v988
          %990 = vdwg.mxu0
          %v993 = vcombine.low %v987, %v989
          %v995 = vunpack.c.l.s4 1983009808
          %v996 = vunpack.c.0.s8 %v995
          %v997 = vlaneseq
          %v998 = vshrl.u32 %v997, 7
          %v999 = vsub.s32 %v996, %v998
          %v1000 = vrot.slane %v993, %v999
          %1002 = vst [vmem:[%s320] sm:$0xf] %v1000
        $region60: #{tpu_custom_call.1} parent=35 // pred_fallthru
          _
        %s1003 = sand.u32 %s146, 1
        %s1004 = scalar_lea.sflag [#allocation5], %s1003
        %s1005 = sand.u32 %s146, 1
        %s1006 = smul.addr %s1005, 4
        %s1007 = scalar_lea.vmem [#allocation11], %s1006
        // Predicated region
        $region61: #{tpu_custom_call.1} parent=35 // pred_check
          %p1008 = pneg %p156
        $region62: #{tpu_custom_call.1} parent=35 // pred_check_branch
          %1010 = sbr.rel (%p1008) target = $region64
        $region63: #{tpu_custom_call.1} parent=35 // pred_region
          %s1011 = smul.u32 2, %s29
          %s1013 = ssub.s32 64, 64
          %1014 = vsyncadd %s1004, %s1013
          %s1015 = smul.addr %s1011, 32
          %s1016 = scalar_lea.hbm %s4, %s1015
          %s1018 = sshll.u32 %s1007, 4
          %s1019 = int_to_ptr.vmem [resolvable:$true] %s1018
          %1021 = dma.vmem_to_hbm [thread:$0]  %s1019, 64, %s1016, %s1004
        $region64: #{tpu_custom_call.1} parent=35 // pred_fallthru
          _
      $region36: #{tpu_custom_call.1} parent=5 // pred_fallthru
        _
      %p1022 = scmp.le.s32.totalorder 2, %s20
      // Predicated region
      $region65: #{tpu_custom_call.1} parent=5 // pred_check
        %p1023 = pneg %p1022
      $region66: #{tpu_custom_call.1} parent=5 // pred_check_branch
        %1025 = sbr.rel (%p1023) target = $region68
      $region67: #{tpu_custom_call.1} parent=5 // pred_region
        %s1026 = ssub.s32 %s20, 2
        // Predicated region
        $region69: #{tpu_custom_call.1} parent=67 // pred_check
          %p1027 = pneg %p162
        $region70: #{tpu_custom_call.1} parent=67 // pred_check_branch
          %1029 = sbr.rel (%p1027) target = $region72
        $region71: #{tpu_custom_call.1} parent=67 // pred_region
          %s1030 = sand.u32 %s147, 1
          %s1031 = scalar_lea.sflag [#allocation5], %s1030
          %s1032 = sand.u32 %s147, 1
          %s1033 = smul.addr %s1032, 4
          %s1034 = scalar_lea.vmem [#allocation11], %s1033
          %1035 = dma.done %s1031, 64
        $region72: #{tpu_custom_call.1} parent=67 // pred_fallthru
          _
      $region68: #{tpu_custom_call.1} parent=5 // pred_fallthru
        _
    $region6: #{tpu_custom_call.1} parent=1 // loop_footer
      %s24 = sadd.s32 1, %s20
    $region7: #{tpu_custom_call.1} parent=1 // loop_footer_branch
      %19 = sbr.rel target = $region3
    $region8: #{tpu_custom_call.1} parent=1 // loop_exit
      _
    %1036 = vsyncpa [#allocation4], 1
    %s1037 = scalar_lea.sflag [#allocation4], 1
    %1038 = vsyncpa %s1037, 1
    %1039 = vsyncpa [#allocation7], 1
    %s1040 = scalar_lea.sflag [#allocation7], 1
    %1041 = vsyncpa %s1040, 1
    %1042 = vsyncpa [#allocation10], 1
    %1043 = vsyncpa [#allocation5], 1
    %s1044 = scalar_lea.sflag [#allocation5], 1
    %1045 = vsyncpa %s1044, 1

</llo_original>
